<compile_context>
chip_gen: v6e
topology: v6e:2x2x1
jax: 0.10.0
libtpu: 0.0.40
codegen_flags: <defaults>
</compile_context>

<pallas_src>
import jax
import jax.numpy as jnp
from jax.experimental import pallas as pl
from jax.experimental.pallas import tpu as pltpu


def _head_kernel(x_ref, w1_ref, b1_ref, w2_ref, b2_ref, o_ref):
    # x_ref : (tb, 2H)  f32   pair-merged CLS rows
    # w1_ref: (H, 2H)   bf16  dense weight, PyTorch (out, in), untransposed
    # b1_ref: (1, H)    f32
    # w2_ref: (Lp, H)   bf16  out_proj weight zero-padded to Lp rows, untransposed
    # b2_ref: (1, Lp)   f32   zero-padded
    # o_ref : (tb, Lp)  f32   lane-dense padded output
    #
    # A . B^T contraction: lhs and rhs both contract on their in-feature axis,
    # so weights stay in PyTorch (out, in) layout (no transpose anywhere).
    dn = (((1,), (1,)), ((), ()))

    x = x_ref[...].astype(w1_ref.dtype)                         # (tb, 2H) bf16
    h = jax.lax.dot_general(x, w1_ref[...], dn,
                            preferred_element_type=jnp.float32)  # (tb, H) f32
    # dropout == identity (eval mode); bias + tanh in f32 (EUP slot, ~free).
    h = jnp.tanh(h + b1_ref[...])

    o = jax.lax.dot_general(h.astype(w2_ref.dtype), w2_ref[...], dn,
                            preferred_element_type=jnp.float32)  # (tb, Lp) f32
    o_ref[...] = (o + b2_ref[...]).astype(o_ref.dtype)


def _round_up(x, m):
    return (x + m - 1) // m * m


def roberta_deep_embedding(features, w_dense, b_dense, w_out, b_out,
                           *, block_b=256, param_dtype=jnp.bfloat16):
    """features: (B, S, H) f32.  Returns (B//2, num_labels) f32.

    w_dense: (H, 2H)  PyTorch-convention (out, in) weight of `dense`.
    b_dense: (H,)
    w_out  : (L, H)   PyTorch-convention weight of `out_proj`.
    b_out  : (L,)
    """
    B, S, H = features.shape
    assert B % 2 == 0, "forward() reshapes pairs of rows; B must be even"
    L = w_out.shape[0]
    Lp = _round_up(L, 128)        # lane-dense output width (unmasked vst)
    B2 = B // 2

    # Glue (plain JAX, all small / one-time):
    #  * CLS slice is a (B, H) strided copy; the pair-merge reshape on the copy
    #    is free (contiguous row-major).
    #  * Weights go in untransposed — just a dtype cast plus a tiny zero-pad of
    #    out_proj rows up to Lp.
    x = features[:, 0, :].reshape(B2, 2 * H)                        # (B2, 2H)
    w1 = w_dense.astype(param_dtype)                                # (H, 2H)
    b1 = b_dense.astype(jnp.float32).reshape(1, H)                  # (1, H)
    w2 = jnp.pad(w_out.astype(param_dtype), ((0, Lp - L), (0, 0)))  # (Lp, H)
    b2 = jnp.pad(b_out.astype(jnp.float32), (0, Lp - L)).reshape(1, Lp)

    tb = min(block_b, B2)
    grid = (pl.cdiv(B2, tb),)

    out = pl.pallas_call(
        _head_kernel,
        out_shape=jax.ShapeDtypeStruct((B2, Lp), jnp.float32),
        grid=grid,
        in_specs=[
            # Activation tile marches over B2; lane dim is the full 2H width.
            pl.BlockSpec((tb, 2 * H), lambda i: (i, 0)),
            # Weights/biases: same block index every step -> stay VMEM-resident.
            pl.BlockSpec((H, 2 * H), lambda i: (0, 0)),
            pl.BlockSpec((1, H), lambda i: (0, 0)),
            pl.BlockSpec((Lp, H), lambda i: (0, 0)),
            pl.BlockSpec((1, Lp), lambda i: (0, 0)),
        ],
        out_specs=pl.BlockSpec((tb, Lp), lambda i: (i, 0)),
        compiler_params=pltpu.CompilerParams(
            dimension_semantics=("parallel",),   # shard row-tiles across TCs (v7x)
            vmem_limit_bytes=32 * 1024 * 1024,   # raise v5e's 16 MiB scoped default
        ),
    )(x, w1, b1, w2, b2)
    return out[:, :L]


def _reference(features, w_dense, b_dense, w_out, b_out):
    B, S, H = features.shape
    x = features[:, 0, :].reshape(B // 2, 2 * H)
    h = jnp.tanh(x @ w_dense.T + b_dense)
    return h @ w_out.T + b_out


if __name__ == "__main__":
    # Small, deterministic config.
    B, S, H, L = 8, 8, 128, 8   # batch, seq, hidden_size, num_labels

    key = jax.random.PRNGKey(0)
    k_feat, k_w1, k_b1, k_w2, k_b2 = jax.random.split(key, 5)

    features = jax.random.normal(k_feat, (B, S, H), dtype=jnp.float32)
    # Deterministic parameter init (synthetic; no checkpoint load).
    w_dense = jax.random.normal(k_w1, (H, 2 * H), dtype=jnp.float32) * 0.02
    b_dense = jax.random.normal(k_b1, (H,), dtype=jnp.float32) * 0.02
    w_out = jax.random.normal(k_w2, (L, H), dtype=jnp.float32) * 0.02
    b_out = jax.random.normal(k_b2, (L,), dtype=jnp.float32) * 0.02

    out = roberta_deep_embedding(features, w_dense, b_dense, w_out, b_out)
    out = jax.block_until_ready(out)

    ref = _reference(features, w_dense, b_dense, w_out, b_out)
    assert out.shape == (B // 2, L)
    # bf16 MXU operands -> relaxed tolerance vs. f32 reference.
    assert jnp.allclose(out, ref, atol=2e-2, rtol=2e-2), "mismatch vs reference"

    print("KERNEL_OK")
</pallas_src>

<mosaic_0001>
module attributes {stable_mosaic.version = 11 : i64} {
  func.func @_head_kernel(%arg0: i32, %arg1: memref<4x256xf32, #tpu.memory_space<vmem>>, %arg2: memref<128x256xbf16, #tpu.memory_space<vmem>>, %arg3: memref<1x128xf32, #tpu.memory_space<vmem>>, %arg4: memref<128x128xbf16, #tpu.memory_space<vmem>>, %arg5: memref<1x128xf32, #tpu.memory_space<vmem>>, %arg6: memref<4x128xf32, #tpu.memory_space<vmem>>) attributes {dimension_semantics = [#tpu.dimension_semantics<parallel>], iteration_bounds = array<i64: 1>, scalar_prefetch = 0 : i64, scratch_operands = 0 : i64, tpu.core_type = #tpu.core_type<tc>, window_params = [{transform_indices = @transform_0, window_bounds = array<i64: 4, 256>}, {pipeline_mode = #tpu.pipeline_mode<synchronous>, transform_indices = @transform_1, window_bounds = array<i64: 128, 256>}, {pipeline_mode = #tpu.pipeline_mode<synchronous>, transform_indices = @transform_2, window_bounds = array<i64: 1, 128>}, {pipeline_mode = #tpu.pipeline_mode<synchronous>, transform_indices = @transform_3, window_bounds = array<i64: 128, 128>}, {pipeline_mode = #tpu.pipeline_mode<synchronous>, transform_indices = @transform_4, window_bounds = array<i64: 1, 128>}, {transform_indices = @transform_5, window_bounds = array<i64: 4, 128>}]} {
    %c0 = arith.constant 0 : index
    %c0_0 = arith.constant 0 : index
    %0 = vector.load %arg1[%c0, %c0_0] : memref<4x256xf32, #tpu.memory_space<vmem>>, vector<4x256xf32>
    %1 = arith.truncf %0 : vector<4x256xf32> to vector<4x256xbf16>
    %c0_1 = arith.constant 0 : index
    %c0_2 = arith.constant 0 : index
    %2 = vector.load %arg2[%c0_1, %c0_2] : memref<128x256xbf16, #tpu.memory_space<vmem>>, vector<128x256xbf16>
    %cst = arith.constant dense<0.000000e+00> : vector<4x128xf32>
    %3 = tpu.matmul %1, %2, %cst {dimension_numbers = #tpu.dot_dimension_numbers<[1], [1], [0], [0], [0, 0, 1, 0], [], []>} : vector<4x256xbf16>, vector<128x256xbf16>, vector<4x128xf32> -> vector<4x128xf32>
    %c0_3 = arith.constant 0 : index
    %c0_4 = arith.constant 0 : index
    %4 = vector.load %arg3[%c0_3, %c0_4] : memref<1x128xf32, #tpu.memory_space<vmem>>, vector<1x128xf32>
    %5 = vector.broadcast %4 : vector<1x128xf32> to vector<4x128xf32>
    %6 = arith.addf %3, %5 : vector<4x128xf32>
    %7 = math.tanh %6 : vector<4x128xf32>
    %8 = arith.truncf %7 : vector<4x128xf32> to vector<4x128xbf16>
    %c0_5 = arith.constant 0 : index
    %c0_6 = arith.constant 0 : index
    %9 = vector.load %arg4[%c0_5, %c0_6] : memref<128x128xbf16, #tpu.memory_space<vmem>>, vector<128x128xbf16>
    %cst_7 = arith.constant dense<0.000000e+00> : vector<4x128xf32>
    %10 = tpu.matmul %8, %9, %cst_7 {dimension_numbers = #tpu.dot_dimension_numbers<[1], [1], [0], [0], [0, 0, 1, 0], [], []>} : vector<4x128xbf16>, vector<128x128xbf16>, vector<4x128xf32> -> vector<4x128xf32>
    %c0_8 = arith.constant 0 : index
    %c0_9 = arith.constant 0 : index
    %11 = vector.load %arg5[%c0_8, %c0_9] : memref<1x128xf32, #tpu.memory_space<vmem>>, vector<1x128xf32>
    %12 = vector.broadcast %11 : vector<1x128xf32> to vector<4x128xf32>
    %13 = arith.addf %10, %12 : vector<4x128xf32>
    %c0_10 = arith.constant 0 : index
    %c0_11 = arith.constant 0 : index
    %14 = vector.load %arg6[%c0_10, %c0_11] : memref<4x128xf32, #tpu.memory_space<vmem>>, vector<4x128xf32>
    tpu.vector_store %arg6[%c0_10, %c0_11], %13 {strides = array<i32>} : memref<4x128xf32, #tpu.memory_space<vmem>>, vector<4x128xf32>,
    return
  }
  func.func @transform_0(%arg0: i32) -> (i32, i32) {
    %c0_i32 = arith.constant 0 : i32
    %c0_i32_0 = arith.constant 0 : i32
    return %arg0, %c0_i32 : i32, i32
  }
  func.func @transform_1(%arg0: i32) -> (i32, i32) {
    %c0_i32 = arith.constant 0 : i32
    %c0_i32_0 = arith.constant 0 : i32
    %c0_i32_1 = arith.constant 0 : i32
    return %c0_i32, %c0_i32_0 : i32, i32
  }
  func.func @transform_2(%arg0: i32) -> (i32, i32) {
    %c0_i32 = arith.constant 0 : i32
    %c0_i32_0 = arith.constant 0 : i32
    %c0_i32_1 = arith.constant 0 : i32
    return %c0_i32, %c0_i32_0 : i32, i32
  }
  func.func @transform_3(%arg0: i32) -> (i32, i32) {
    %c0_i32 = arith.constant 0 : i32
    %c0_i32_0 = arith.constant 0 : i32
    %c0_i32_1 = arith.constant 0 : i32
    return %c0_i32, %c0_i32_0 : i32, i32
  }
  func.func @transform_4(%arg0: i32) -> (i32, i32) {
    %c0_i32 = arith.constant 0 : i32
    %c0_i32_0 = arith.constant 0 : i32
    %c0_i32_1 = arith.constant 0 : i32
    return %c0_i32, %c0_i32_0 : i32, i32
  }
  func.func @transform_5(%arg0: i32) -> (i32, i32) {
    %c0_i32 = arith.constant 0 : i32
    %c0_i32_0 = arith.constant 0 : i32
    return %arg0, %c0_i32 : i32, i32
  }
}

</mosaic_0001>

<llo_original>
// kernel: tpu_custom_call.1
$region0: #{tpu_custom_call.1}
  #allocation0 [shape = 'u32[]', space=smem, size = 0x4, offset = 0x4, fixed_abs, tag = 'smem constant byte address 0x4 - core index']
  #allocation1 [shape = 'u32[144,128]{1,0:T(1,128)}', space=vmem, size = 0x12000, scoped, tag = 'internal scratch']
  %s0 = inlined_call_operand.hbm [shape: f32[4,256], index: 0, kind: input, shape index: {}]
  %s1 = inlined_call_operand.hbm [shape: bf16[128,256], index: 1, kind: input, shape index: {}]
  %s2 = inlined_call_operand.vmem [shape: f32[1,128], index: 2, kind: input, shape index: {}]
  %s3 = inlined_call_operand.hbm [shape: bf16[128,128], index: 3, kind: input, shape index: {}]
  %s4 = inlined_call_operand.vmem [shape: f32[1,128], index: 4, kind: input, shape index: {}]
  %s5 = inlined_call_operand.hbm [shape: f32[4,128], index: 5, kind: output, shape index: {}]
  %s6 = sld [smem:[#allocation0]]
  $region42: #{tpu_custom_call.1} parent=0
    _
  %s8 = ssub.s32 1, %s6
  %s9 = scalar_select 0, %s8, %s6
  $region1: #{tpu_custom_call.1} parent=0
    #allocation2 [shape = 'u8[4096]{0}', space=vmem, size = 0x1000, scoped, tag = 'input window, operand 0, single buffered']
    #allocation3 [shape = 's32[1]{0}', space=sflag, size = 0x4, scoped, tag = 'scoped memory for tpu_custom_call.1']
    #allocation4 [shape = 's32[1]{0}', space=sflag, size = 0x4, scoped, tag = 'scoped memory for tpu_custom_call.1']
    #allocation5 [shape = 'u8[65536]{0}', space=vmem, size = 0x10000, scoped, tag = 'input window, operand 1, single buffered']
    #allocation6 [shape = 's32[1]{0}', space=sflag, size = 0x4, scoped, tag = 'scoped memory for tpu_custom_call.1']
    #allocation7 [shape = 'u8[32768]{0}', space=vmem, size = 0x8000, scoped, tag = 'input window, operand 3, single buffered']
    #allocation8 [shape = 'u8[2048]{0}', space=vmem, size = 0x800, scoped, tag = 'output window, operand 0, single buffered']
    %10 = vsyncpa [#allocation3], 0
    %11 = vsyncpa [#allocation6], 0
    %12 = vsyncpa [#allocation4], 0
    // Predicated region
    $region2: #{tpu_custom_call.1} parent=1 // pred_check
      _
    $region3: #{tpu_custom_call.1} parent=1 // pred_check_branch
      %14 = sbr.rel (0) target = $region5
    $region4: #{tpu_custom_call.1} parent=1 // pred_region
      %s16 = ssub.s32 128, 128
      %17 = vsyncadd [#allocation3], %s16
      %s19 = sshll.u32 [#allocation2], 4
      %s20 = int_to_ptr.vmem [resolvable:$true] %s19
      %22 = dma.hbm_to_vmem [thread:$0]  %s0, 128, %s20, [#allocation3]
    $region5: #{tpu_custom_call.1} parent=1 // pred_fallthru
      _
    // Predicated region
    $region6: #{tpu_custom_call.1} parent=1 // pred_check
      _
    $region7: #{tpu_custom_call.1} parent=1 // pred_check_branch
      %24 = sbr.rel (0) target = $region9
    $region8: #{tpu_custom_call.1} parent=1 // pred_region
      %s26 = ssub.s32 2048, 2048
      %27 = vsyncadd [#allocation6], %s26
      %s28 = sshll.u32 [#allocation5], 4
      %s29 = int_to_ptr.vmem [resolvable:$true] %s28
      %34 = dma.hbm_to_vmem [thread:$0]  %s1, 2048, %s29, [#allocation6], 128, 128, 8
    $region9: #{tpu_custom_call.1} parent=1 // pred_fallthru
      _
    // Predicated region
    $region10: #{tpu_custom_call.1} parent=1 // pred_check
      _
    $region11: #{tpu_custom_call.1} parent=1 // pred_check_branch
      %36 = sbr.rel (0) target = $region13
    $region12: #{tpu_custom_call.1} parent=1 // pred_region
      _
    $region13: #{tpu_custom_call.1} parent=1 // pred_fallthru
      _
    // Predicated region
    $region14: #{tpu_custom_call.1} parent=1 // pred_check
      _
    $region15: #{tpu_custom_call.1} parent=1 // pred_check_branch
      %38 = sbr.rel (0) target = $region17
    $region16: #{tpu_custom_call.1} parent=1 // pred_region
      %s40 = ssub.s32 1024, 1024
      %41 = vsyncadd [#allocation6], %s40
      %s42 = sshll.u32 [#allocation7], 4
      %s43 = int_to_ptr.vmem [resolvable:$true] %s42
      %48 = dma.hbm_to_vmem [thread:$0]  %s3, 1024, %s43, [#allocation6], 64, 64, 4
    $region17: #{tpu_custom_call.1} parent=1 // pred_fallthru
      _
    // Predicated region
    $region18: #{tpu_custom_call.1} parent=1 // pred_check
      _
    $region19: #{tpu_custom_call.1} parent=1 // pred_check_branch
      %50 = sbr.rel (0) target = $region21
    $region20: #{tpu_custom_call.1} parent=1 // pred_region
      _
    $region21: #{tpu_custom_call.1} parent=1 // pred_fallthru
      _
    // Predicated region
    $region22: #{tpu_custom_call.1} parent=1 // pred_check
      _
    $region23: #{tpu_custom_call.1} parent=1 // pred_check_branch
      %52 = sbr.rel (0) target = $region25
    $region24: #{tpu_custom_call.1} parent=1 // pred_region
      %53 = dma.done [#allocation3], 128
    $region25: #{tpu_custom_call.1} parent=1 // pred_fallthru
      _
    // Predicated region
    $region26: #{tpu_custom_call.1} parent=1 // pred_check
      _
    $region27: #{tpu_custom_call.1} parent=1 // pred_check_branch
      %55 = sbr.rel (0) target = $region29
    $region28: #{tpu_custom_call.1} parent=1 // pred_region
      %56 = dma.done [#allocation6], 2048
    $region29: #{tpu_custom_call.1} parent=1 // pred_fallthru
      _
    // Predicated region
    $region30: #{tpu_custom_call.1} parent=1 // pred_check
      _
    $region31: #{tpu_custom_call.1} parent=1 // pred_check_branch
      %58 = sbr.rel (0) target = $region33
    $region32: #{tpu_custom_call.1} parent=1 // pred_region
      %59 = dma.done [#allocation6], 1024
    $region33: #{tpu_custom_call.1} parent=1 // pred_fallthru
      _
    %v61 = vld [vmem:[#allocation2] sm:$0xff]
    %v63 = vcombine.high %v61, %v61
    %v65 = vpack.c.bf16 %v61, %v61
    %v66 = vpack.c.bf16 %v63, %v63
    %v67 = vld [vmem:[#allocation5] sm:$0xff]
    %v68 = vld [vmem:[#allocation5 + $0x8] sm:$0xff]
    %v69 = vld [vmem:[#allocation5 + $0x10] sm:$0xff]
    %v70 = vld [vmem:[#allocation5 + $0x18] sm:$0xff]
    %v71 = vld [vmem:[#allocation5 + $0x20] sm:$0xff]
    %v72 = vld [vmem:[#allocation5 + $0x28] sm:$0xff]
    %v73 = vld [vmem:[#allocation5 + $0x30] sm:$0xff]
    %v74 = vld [vmem:[#allocation5 + $0x38] sm:$0xff]
    %v75 = vld [vmem:[#allocation5 + $0x40] sm:$0xff]
    %v76 = vld [vmem:[#allocation5 + $0x48] sm:$0xff]
    %v77 = vld [vmem:[#allocation5 + $0x50] sm:$0xff]
    %v78 = vld [vmem:[#allocation5 + $0x58] sm:$0xff]
    %v79 = vld [vmem:[#allocation5 + $0x60] sm:$0xff]
    %v80 = vld [vmem:[#allocation5 + $0x68] sm:$0xff]
    %v81 = vld [vmem:[#allocation5 + $0x70] sm:$0xff]
    %v82 = vld [vmem:[#allocation5 + $0x78] sm:$0xff]
    %v83 = vld [vmem:[%s2] sm:$0x1]
    %v85 = vlaneseq
    %v86 = vshrl.u32 %v85, 7
    %v87 = vsub.s32 0, %v86
    %v88 = vrot.slane %v83, %v87
    %v106 = vunpack.c.l.b16 %v67
    %v107 = vunpack.c.h.b16 %v67
    %v108 = vunpack.c.l.b16 %v68
    %v109 = vunpack.c.h.b16 %v68
    %v110 = vunpack.c.l.b16 %v69
    %v111 = vunpack.c.h.b16 %v69
    %v112 = vunpack.c.l.b16 %v70
    %v113 = vunpack.c.h.b16 %v70
    %v114 = vunpack.c.l.b16 %v71
    %v115 = vunpack.c.h.b16 %v71
    %v116 = vunpack.c.l.b16 %v72
    %v117 = vunpack.c.h.b16 %v72
    %v118 = vunpack.c.l.b16 %v73
    %v119 = vunpack.c.h.b16 %v73
    %v120 = vunpack.c.l.b16 %v74
    %v121 = vunpack.c.h.b16 %v74
    %v122 = vunpack.c.l.b16 %v75
    %v123 = vunpack.c.h.b16 %v75
    %v124 = vunpack.c.l.b16 %v76
    %v125 = vunpack.c.h.b16 %v76
    %v126 = vunpack.c.l.b16 %v77
    %v127 = vunpack.c.h.b16 %v77
    %v128 = vunpack.c.l.b16 %v78
    %v129 = vunpack.c.h.b16 %v78
    %v130 = vunpack.c.l.b16 %v79
    %v131 = vunpack.c.h.b16 %v79
    %v132 = vunpack.c.l.b16 %v80
    %v133 = vunpack.c.h.b16 %v80
    %v134 = vunpack.c.l.b16 %v81
    %v135 = vunpack.c.h.b16 %v81
    %v136 = vunpack.c.l.b16 %v82
    %v137 = vunpack.c.h.b16 %v82
    %v138 = vpack.c.b16 %v108, %v106
    %v139 = vpack.c.b16 %v109, %v107
    %v140 = vpack.c.b16 %v112, %v110
    %v141 = vpack.c.b16 %v113, %v111
    %v142 = vpack.c.b16 %v116, %v114
    %v143 = vpack.c.b16 %v117, %v115
    %v144 = vpack.c.b16 %v120, %v118
    %v145 = vpack.c.b16 %v121, %v119
    %v146 = vpack.c.b16 %v124, %v122
    %v147 = vpack.c.b16 %v125, %v123
    %v148 = vpack.c.b16 %v128, %v126
    %v149 = vpack.c.b16 %v129, %v127
    %v150 = vpack.c.b16 %v132, %v130
    %v151 = vpack.c.b16 %v133, %v131
    %v152 = vpack.c.b16 %v136, %v134
    %v153 = vpack.c.b16 %v137, %v135
    %170 = vmatprep.subr.bf16.mxu0 %v153
    %171 = vmatpush1.bf16.xpose.msra.mxu0 %v152
    %172 = vmatprep.subr.bf16.mxu0 %v151
    %173 = vmatpush1.bf16.xpose.msra.mxu0 %v150
    %174 = vmatprep.subr.bf16.mxu0 %v149
    %175 = vmatpush1.bf16.xpose.msra.mxu0 %v148
    %176 = vmatprep.subr.bf16.mxu0 %v147
    %177 = vmatpush1.bf16.xpose.msra.mxu0 %v146
    %178 = vmatprep.subr.bf16.mxu0 %v145
    %179 = vmatpush1.bf16.xpose.msra.mxu0 %v144
    %180 = vmatprep.subr.bf16.mxu0 %v143
    %181 = vmatpush1.bf16.xpose.msra.mxu0 %v142
    %182 = vmatprep.subr.bf16.mxu0 %v141
    %183 = vmatpush1.bf16.xpose.msra.mxu0 %v140
    %184 = vmatprep.subr.bf16.mxu0 %v139
    %185 = vmatpush1.bf16.xpose.msra.mxu0 %v138
    %186 = vmatprep.subr.bf16.mxu0 0
    %187 = vmatpush2.bf16.xpose.msra.mxu0 0
    %188 = vmatprep.subr.bf16.mxu0 0
    %189 = vmatpush2.bf16.xpose.msra.mxu0 0
    %190 = vmatprep.subr.bf16.mxu0 0
    %191 = vmatpush2.bf16.xpose.msra.mxu0 0
    %192 = vmatprep.subr.bf16.mxu0 0
    %193 = vmatpush2.bf16.xpose.msra.mxu0 0
    %194 = vmatprep.subr.bf16.mxu0 0
    %195 = vmatpush2.bf16.xpose.msra.mxu0 0
    %196 = vmatprep.subr.bf16.mxu0 0
    %197 = vmatpush2.bf16.xpose.msra.mxu0 0
    %198 = vmatprep.subr.bf16.mxu0 0
    %199 = vmatpush2.bf16.xpose.msra.mxu0 0
    %200 = vmatprep.subr.bf16.mxu0 0
    %201 = vmatpush2.bf16.xpose.msra.mxu0 0
    %202 = vmatprep.mubr.bf16.mxu0 %v66
    %203 = vmatmul.mubr.bf16.gmra.mxu0 %v65
    %v204 = vpop.f32.mrf.mxu0
    %v205 = vadd.f32 %v88, %v204
    %v206 = vpop.f32.mrf.mxu0
    %v207 = vpop.f32.mrf.mxu0
    %v208 = vpop.f32.mrf.mxu0
    %209 = vdwg.mxu0
    %v210 = vtanh.pop %v205
    %v211 = vpack.c.bf16 %v210, %v210
    %v212 = vld [vmem:[#allocation7] sm:$0xf]
    %v213 = vld [vmem:[#allocation7 + $0x4] sm:$0xf]
    %v214 = vld [vmem:[#allocation7 + $0x8] sm:$0xf]
    %v215 = vld [vmem:[#allocation7 + $0xc] sm:$0xf]
    %v216 = vld [vmem:[#allocation7 + $0x10] sm:$0xf]
    %v217 = vld [vmem:[#allocation7 + $0x14] sm:$0xf]
    %v218 = vld [vmem:[#allocation7 + $0x18] sm:$0xf]
    %v219 = vld [vmem:[#allocation7 + $0x1c] sm:$0xf]
    %v220 = vld [vmem:[#allocation7 + $0x20] sm:$0xf]
    %v221 = vld [vmem:[#allocation7 + $0x24] sm:$0xf]
    %v222 = vld [vmem:[#allocation7 + $0x28] sm:$0xf]
    %v223 = vld [vmem:[#allocation7 + $0x2c] sm:$0xf]
    %v224 = vld [vmem:[#allocation7 + $0x30] sm:$0xf]
    %v225 = vld [vmem:[#allocation7 + $0x34] sm:$0xf]
    %v226 = vld [vmem:[#allocation7 + $0x38] sm:$0xf]
    %v227 = vld [vmem:[#allocation7 + $0x3c] sm:$0xf]
    %v228 = vld [vmem:[%s4] sm:$0x1]
    %v230 = vlaneseq
    %v231 = vshrl.u32 %v230, 7
    %v232 = vsub.s32 0, %v231
    %v233 = vrot.slane %v228, %v232
    %v251 = vunpack.c.l.b16 %v212
    %v252 = vunpack.c.l.b16 %v213
    %v253 = vunpack.c.l.b16 %v214
    %v254 = vunpack.c.l.b16 %v215
    %v255 = vunpack.c.l.b16 %v216
    %v256 = vunpack.c.l.b16 %v217
    %v257 = vunpack.c.l.b16 %v218
    %v258 = vunpack.c.l.b16 %v219
    %v259 = vunpack.c.l.b16 %v220
    %v260 = vunpack.c.l.b16 %v221
    %v261 = vunpack.c.l.b16 %v222
    %v262 = vunpack.c.l.b16 %v223
    %v263 = vunpack.c.l.b16 %v224
    %v264 = vunpack.c.l.b16 %v225
    %v265 = vunpack.c.l.b16 %v226
    %v266 = vunpack.c.l.b16 %v227
    %v267 = vpack.c.b16 %v252, %v251
    %v268 = vpack.c.b16 %v254, %v253
    %v269 = vpack.c.b16 %v256, %v255
    %v270 = vpack.c.b16 %v258, %v257
    %v271 = vpack.c.b16 %v260, %v259
    %v272 = vpack.c.b16 %v262, %v261
    %v273 = vpack.c.b16 %v264, %v263
    %v274 = vpack.c.b16 %v266, %v265
    %283 = vmatprep.subr.bf16.mxu0 0
    %284 = vmatpush1.bf16.xpose.msra.mxu0 %v274
    %285 = vmatprep.subr.bf16.mxu0 0
    %286 = vmatpush1.bf16.xpose.msra.mxu0 %v273
    %287 = vmatprep.subr.bf16.mxu0 0
    %288 = vmatpush1.bf16.xpose.msra.mxu0 %v272
    %289 = vmatprep.subr.bf16.mxu0 0
    %290 = vmatpush1.bf16.xpose.msra.mxu0 %v271
    %291 = vmatprep.subr.bf16.mxu0 0
    %292 = vmatpush1.bf16.xpose.msra.mxu0 %v270
    %293 = vmatprep.subr.bf16.mxu0 0
    %294 = vmatpush1.bf16.xpose.msra.mxu0 %v269
    %295 = vmatprep.subr.bf16.mxu0 0
    %296 = vmatpush1.bf16.xpose.msra.mxu0 %v268
    %297 = vmatprep.subr.bf16.mxu0 0
    %298 = vmatpush1.bf16.xpose.msra.mxu0 %v267
    %299 = vmatprep.subr.bf16.mxu0 0
    %300 = vmatpush2.bf16.xpose.msra.mxu0 0
    %301 = vmatprep.subr.bf16.mxu0 0
    %302 = vmatpush2.bf16.xpose.msra.mxu0 0
    %303 = vmatprep.subr.bf16.mxu0 0
    %304 = vmatpush2.bf16.xpose.msra.mxu0 0
    %305 = vmatprep.subr.bf16.mxu0 0
    %306 = vmatpush2.bf16.xpose.msra.mxu0 0
    %307 = vmatprep.subr.bf16.mxu0 0
    %308 = vmatpush2.bf16.xpose.msra.mxu0 0
    %309 = vmatprep.subr.bf16.mxu0 0
    %310 = vmatpush2.bf16.xpose.msra.mxu0 0
    %311 = vmatprep.subr.bf16.mxu0 0
    %312 = vmatpush2.bf16.xpose.msra.mxu0 0
    %313 = vmatprep.subr.bf16.mxu0 0
    %314 = vmatpush2.bf16.xpose.msra.mxu0 0
    %315 = vmatprep.mubr.bf16.mxu0 0
    %316 = vmatmul.mubr.bf16.gmra.mxu0 %v211
    %v317 = vpop.f32.mrf.mxu0
    %v318 = vadd.f32 %v233, %v317
    %v319 = vpop.f32.mrf.mxu0
    %v320 = vpop.f32.mrf.mxu0
    %v321 = vpop.f32.mrf.mxu0
    %322 = vdwg.mxu0
    %323 = vst [vmem:[#allocation8] sm:$0xf] %v318
    // Predicated region
    $region34: #{tpu_custom_call.1} parent=1 // pred_check
      _
    $region35: #{tpu_custom_call.1} parent=1 // pred_check_branch
      %325 = sbr.rel (0) target = $region37
    $region36: #{tpu_custom_call.1} parent=1 // pred_region
      %s327 = ssub.s32 64, 64
      %328 = vsyncadd [#allocation4], %s327
      %s330 = sshll.u32 [#allocation8], 4
      %s331 = int_to_ptr.vmem [resolvable:$true] %s330
      %333 = dma.vmem_to_hbm [thread:$0]  %s331, 64, %s5, [#allocation4]
    $region37: #{tpu_custom_call.1} parent=1 // pred_fallthru
      _
    // Predicated region
    $region38: #{tpu_custom_call.1} parent=1 // pred_check
      _
    $region39: #{tpu_custom_call.1} parent=1 // pred_check_branch
      %335 = sbr.rel (0) target = $region41
    $region40: #{tpu_custom_call.1} parent=1 // pred_region
      %336 = dma.done [#allocation4], 64
    $region41: #{tpu_custom_call.1} parent=1 // pred_fallthru
      _
    %337 = vsyncpa [#allocation3], 1
    %338 = vsyncpa [#allocation6], 1
    %339 = vsyncpa [#allocation4], 1

</llo_original>
